<compile_context>
chip_gen: v7x
topology: tpu7x:2x2x1
jax: 0.10.0
libtpu: 0.0.40
codegen_flags: <defaults>
</compile_context>

<pallas_src>
import jax
import jax.numpy as jnp
from jax.experimental import pallas as pl
from jax.experimental.pallas import tpu as pltpu


def _flatten_alias_kernel(x_hbm_ref, o_hbm_ref, token_smem):
    # Output is aliased to the input (input_output_aliases={0: 0}), so the
    # flattened data already lives in the output buffer.  Nothing to move.
    # Write an SMEM token so the kernel body is non-empty; zero HBM/VMEM work.
    del x_hbm_ref, o_hbm_ref
    token_smem[0] = jnp.int32(1)


def _flatten_dma_copy_kernel(x_hbm_ref, o_hbm_ref, copy_sem):
    # Single HBM->HBM DMA: no VMEM round trip, no vector loads/stores, no grid.
    cp = pltpu.make_async_copy(x_hbm_ref, o_hbm_ref, copy_sem)
    cp.start()
    cp.wait()


def _flat_dims(x):
    n = x.shape[0]
    f = 1
    for d in x.shape[1:]:
        f *= d
    return n, f


@jax.jit
def flatten_forward(x):
    """Flatten().forward(x): zero-copy path (output aliases input storage)."""
    n, f = _flat_dims(x)
    x2d = jnp.reshape(x, (n, f))  # metadata-only, row-major == torch .view
    return pl.pallas_call(
        _flatten_alias_kernel,
        out_shape=jax.ShapeDtypeStruct((n, f), x.dtype),
        in_specs=[pl.BlockSpec(memory_space=pl.ANY)],
        out_specs=pl.BlockSpec(memory_space=pl.ANY),
        scratch_shapes=[pltpu.SMEM((1,), jnp.int32)],
        input_output_aliases={0: 0},
    )(x2d)


@jax.jit
def flatten_forward_copy(x):
    """Flatten().forward(x), materializing a fresh output buffer with one
    HBM->HBM DMA (use when the input buffer cannot be donated/aliased)."""
    n, f = _flat_dims(x)
    x2d = jnp.reshape(x, (n, f))
    return pl.pallas_call(
        _flatten_dma_copy_kernel,
        out_shape=jax.ShapeDtypeStruct((n, f), x.dtype),
        in_specs=[pl.BlockSpec(memory_space=pl.ANY)],
        out_specs=pl.BlockSpec(memory_space=pl.ANY),
        scratch_shapes=[pltpu.SemaphoreType.DMA],
    )(x2d)


if __name__ == "__main__":
    key = jax.random.PRNGKey(0)

    # Small NCHW input, consistent with what Flatten sees after a conv tower.
    x = jax.random.normal(key, (2, 4, 16, 16), dtype=jnp.float32)
    ref = jnp.reshape(x, (2, 4 * 16 * 16))

    y_alias = flatten_forward(x)
    y_copy = flatten_forward_copy(x)
    jax.block_until_ready((y_alias, y_copy))

    assert y_alias.shape == (2, 1024) and y_alias.dtype == x.dtype, y_alias.shape
    assert y_copy.shape == (2, 1024) and y_copy.dtype == x.dtype, y_copy.shape
    assert bool(jnp.all(y_alias == ref))
    assert bool(jnp.all(y_copy == ref))

    # Ragged, sub-(8,128) shape with a narrow dtype: pl.ANY refs carry no
    # tiling constraint, so the old "full-dimension fallback" / masked-store
    # concerns no longer exist.
    x2 = jax.random.normal(jax.random.PRNGKey(0), (3, 5, 7), dtype=jnp.bfloat16)
    y2 = flatten_forward(x2)
    jax.block_until_ready(y2)
    assert y2.shape == (3, 35) and y2.dtype == x2.dtype
    assert bool(jnp.all(y2 == jnp.reshape(x2, (3, 35))))

    print("KERNEL_OK")
</pallas_src>

<mosaic_0001>
module attributes {stable_mosaic.version = 11 : i64} {
  func.func @_flatten_alias_kernel(%arg0: memref<2x1024xf32, #tpu.memory_space<any>>, %arg1: memref<2x1024xf32, #tpu.memory_space<any>>, %arg2: memref<1xi32, #tpu.memory_space<smem>>) attributes {dimension_semantics = [], scalar_prefetch = 0 : i64, scratch_operands = 1 : i64, tpu.core_type = #tpu.core_type<tc>} {
    %c1_i32 = arith.constant 1 : i32
    %c0 = arith.constant 0 : index
    %0 = memref.load %arg2[%c0] : memref<1xi32, #tpu.memory_space<smem>>
    memref.store %c1_i32, %arg2[%c0] : memref<1xi32, #tpu.memory_space<smem>>
    return
  }
}

</mosaic_0001>

<llo_original>
// kernel: flatten_forward.1
$region0: #{flatten_forward.1}
  #allocation0 [shape = 'u32[]', space=smem, size = 0x4, offset = 0x4, fixed_abs, tag = 'smem constant byte address 0x4 - core index']
  #allocation1 [shape = 'u32[144,128]{1,0:T(1,128)}', space=vmem, size = 0x12000, scoped, tag = 'internal scratch']
  #allocation2 [shape = 's32[1]{0:T(128)}', space=smem, size = 0x200, scoped, tag = 'scratch operand']
  %s0 = inlined_call_operand.hbm [shape: f32[2,1024], index: 0, kind: input, shape index: {}, may-alias: {0,1}]
  %s1 = inlined_call_operand.hbm [shape: f32[2,1024], index: 1, kind: output, shape index: {}, may-alias: {0,1}]
  %s2 = sld [smem:[#allocation0]]
  $region2: #{flatten_forward.1} parent=0
    _
  %s4 = ssub.s32 1, %s2
  %s5 = scalar_select 0, %s4, %s2
  %s6 = scalar_lea.smem [#allocation2], 0
  %7 = sst [smem:[%s6]] 1

</llo_original>
